<compile_context>
chip_gen: v7x
topology: tpu7x:2x2x1
jax: 0.10.0
libtpu: 0.0.40
codegen_flags: <defaults>
</compile_context>

<pallas_src>
import jax
import jax.numpy as jnp
from jax.experimental import pallas as pl
from jax.experimental.pallas import tpu as pltpu


def _token_embedding_kernel(xp_ref, w_ref, o_ref):
    # xp_ref: (L_pad + 2*pad, C_in)  circularly padded input (whole sequence,
    #                                resident per batch element)
    # w_ref : (K, C_in, d_pad)       conv taps, resident (constant block index)
    # o_ref : (TL, d_pad)            one lane-dense output tile
    t = pl.program_id(1)
    TL = o_ref.shape[0]
    K = w_ref.shape[0]
    start = pl.multiple_of(t * TL, TL)

    # out[start + j] = sum_k x_pad[start + j + k] @ w[k]
    acc = jnp.dot(xp_ref[pl.ds(start, TL), :], w_ref[0],
                  preferred_element_type=jnp.float32)
    for k in range(1, K):                      # static unroll over taps
        acc = acc + jnp.dot(xp_ref[pl.ds(start + k, TL), :], w_ref[k],
                            preferred_element_type=jnp.float32)
    o_ref[...] = acc.astype(o_ref.dtype)


def _round_up(v, m):
    return ((v + m - 1) // m) * m


def _choose_l_tile(L, d_pad, itemsize, fixed_bytes, budget=40 * 1024 * 1024):
    """Largest multiple-of-8 sequence tile that fits the VMEM budget (<= 2048)."""
    per_row = d_pad * (2 * itemsize + 4)        # 2x output buffers + f32 acc
    avail = max(budget - fixed_bytes, 8 * per_row)
    tl = min(2048, _round_up(L, 8), (avail // per_row) // 8 * 8)
    tl = max(int(tl), 8)
    # Prefer an exact divisor of L near tl (avoids tail padding + post-slice),
    # but never drop below tl/2 (keeps tiles large enough to amortize the
    # ~0.35 us/step pipeline overhead).
    if L % 8 == 0 and L > tl:
        for d in range(tl, max(tl // 2, 8) - 1, -8):
            if L % d == 0:
                return d
    return tl


def token_embedding(x, w):
    """x: (B, L, C_in), w: (K, C_in, d_model) -> (B, L, d_model)."""
    B, L, C_in = x.shape
    K, Cw, d_model = w.shape
    assert Cw == C_in
    # TODO(synk): even kernel_size changes the output length in torch's
    # circular conv; this kernel (like the module default K=3) assumes odd K.
    assert K % 2 == 1, "circular 'same' Conv1d requires odd kernel_size"
    pad = (K - 1) // 2
    itemsize = jnp.dtype(x.dtype).itemsize

    # Lane-dense output: pad d_model up to a multiple of 128 (zero columns).
    d_pad = _round_up(d_model, 128)
    w_k = w.astype(x.dtype)
    if d_pad != d_model:
        w_k = jnp.pad(w_k, ((0, 0), (0, 0), (0, d_pad - d_model)))

    # Padded-size-aware fixed VMEM cost (resident x + w blocks, x2 buffers).
    c_lanes = _round_up(C_in, 128)
    x_row_bytes = c_lanes * itemsize
    w_bytes = K * _round_up(C_in, 8) * d_pad * itemsize
    fixed = 2 * _round_up(L + 2 * pad + 2048, 8) * x_row_bytes + 2 * w_bytes

    TL = _choose_l_tile(L, d_pad, itemsize, fixed)
    NT = pl.cdiv(L, TL)
    L_pad = NT * TL

    # Circular "same" padding (plus zero tail padding up to the tile grid):
    #   xp[:, i] = x[:, (i - pad) mod L]   for i < L + 2*pad.
    xp = jnp.concatenate([x[:, L - pad:, :], x, x[:, :pad, :]], axis=1)
    if L_pad != L:
        xp = jnp.pad(xp, ((0, 0), (0, L_pad - L), (0, 0)))
    Lx = L_pad + 2 * pad

    # VMEM need incl. lane/sublane padding; raise the scoped limit only when
    # needed, capped at 48 MiB (v7x physical VMEM is only 64 MiB).
    o_bytes = _round_up(TL, 8) * d_pad * itemsize
    acc_bytes = TL * d_pad * 4
    vmem_need = (2 * _round_up(Lx, 8) * x_row_bytes + 2 * w_bytes
                 + 2 * o_bytes + acc_bytes)
    cp_kwargs = dict(dimension_semantics=("parallel", "parallel"))
    if 2 * vmem_need > 16 * 1024 * 1024:
        cp_kwargs["vmem_limit_bytes"] = int(
            min(max(2 * vmem_need, 32 * 1024 * 1024), 48 * 1024 * 1024))

    cost = pl.CostEstimate(
        flops=2 * B * L * K * C_in * d_model,
        transcendentals=0,
        bytes_accessed=int(B * L * (C_in + d_model) * itemsize
                           + K * C_in * d_model * itemsize))

    out = pl.pallas_call(
        _token_embedding_kernel,
        out_shape=jax.ShapeDtypeStruct((B, L_pad, d_pad), x.dtype),
        grid_spec=pltpu.PrefetchScalarGridSpec(
            num_scalar_prefetch=0,
            grid=(B, NT),
            in_specs=[
                # Full padded sequence per batch element, resident over t.
                # TODO(synk): for very long L with tiny C_in this block pads
                # 128/C_in x on the lane axis; a lane-dense repack would help.
                pl.BlockSpec((None, Lx, C_in), lambda b, t: (b, 0, 0)),
                # Conv taps: constant block index -> DMA'd once, resident.
                pl.BlockSpec((K, C_in, d_pad), lambda b, t: (0, 0, 0)),
            ],
            out_specs=pl.BlockSpec((None, TL, d_pad), lambda b, t: (b, t, 0)),
        ),
        compiler_params=pltpu.CompilerParams(**cp_kwargs),
        cost_estimate=cost,
    )(xp, w_k)

    if L_pad != L or d_pad != d_model:
        out = out[:, :L, :d_model]
    return out


def _reference(x, w):
    # Pure-JAX reference of torch's circular-padded cross-correlation Conv1d.
    K = w.shape[0]
    pad = (K - 1) // 2
    out = jnp.zeros((x.shape[0], x.shape[1], w.shape[2]), jnp.float32)
    for k in range(K):
        shifted = jnp.roll(x, shift=pad - k, axis=1)
        out = out + jnp.einsum("blc,co->blo", shifted, w[k])
    return out


if __name__ == "__main__":
    # Small shapes: batch=2, seq=16, input_channels=4, d_model=32, kernel=3
    B, L, C_in, d_model, K = 2, 16, 4, 32, 3

    key = jax.random.PRNGKey(0)
    kx, kw = jax.random.split(key)

    x = jax.random.normal(kx, (B, L, C_in), dtype=jnp.float32)

    # Deterministic Kaiming-normal init (fan_in, leaky_relu slope=0.01),
    # matching nn.init.kaiming_normal_ on a Conv1d weight of shape
    # (d_model, C_in, K); stored here permuted to (K, C_in, d_model).
    fan_in = C_in * K
    gain = (2.0 / (1.0 + 0.01 ** 2)) ** 0.5
    std = gain / (fan_in ** 0.5)
    w = std * jax.random.normal(kw, (K, C_in, d_model), dtype=jnp.float32)

    out = token_embedding(x, w)
    out = jax.block_until_ready(out)

    ref = _reference(x, w)
    assert out.shape == (B, L, d_model)
    assert jnp.allclose(out, ref, atol=1e-4, rtol=1e-4)

    print("KERNEL_OK")
</pallas_src>

<mosaic_0001>
module attributes {stable_mosaic.version = 11 : i64} {
  func.func @_token_embedding_kernel(%arg0: i32, %arg1: i32, %arg2: memref<1x18x4xf32, #tpu.memory_space<vmem>>, %arg3: memref<3x4x128xf32, #tpu.memory_space<vmem>>, %arg4: memref<1x16x128xf32, #tpu.memory_space<vmem>>) attributes {dimension_semantics = [#tpu.dimension_semantics<parallel>, #tpu.dimension_semantics<parallel>], iteration_bounds = array<i64: 2, 1>, scalar_prefetch = 0 : i64, scratch_operands = 0 : i64, tpu.core_type = #tpu.core_type<tc>, window_params = [{transform_indices = @transform_0, window_bounds = array<i64: 1, 18, 4>}, {pipeline_mode = #tpu.pipeline_mode<synchronous>, transform_indices = @transform_1, window_bounds = array<i64: 3, 4, 128>}, {transform_indices = @transform_2, window_bounds = array<i64: 1, 16, 128>}]} {
    %c16_i32 = arith.constant 16 : i32
    %0 = arith.muli %arg1, %c16_i32 : i32
    %1 = tpu.assume_multiple %0, 16 : i32
    %c0 = arith.constant 0 : index
    %2 = arith.index_cast %1 : i32 to index
    %c0_0 = arith.constant 0 : index
    %3 = vector.load %arg2[%c0, %2, %c0_0] : memref<1x18x4xf32, #tpu.memory_space<vmem>>, vector<1x16x4xf32>
    %4 = vector.shape_cast %3 : vector<1x16x4xf32> to vector<16x4xf32>
    %c0_1 = arith.constant 0 : index
    %c0_2 = arith.constant 0 : index
    %c0_3 = arith.constant 0 : index
    %5 = vector.load %arg3[%c0_1, %c0_2, %c0_3] : memref<3x4x128xf32, #tpu.memory_space<vmem>>, vector<1x4x128xf32>
    %6 = vector.shape_cast %5 : vector<1x4x128xf32> to vector<4x128xf32>
    %cst = arith.constant dense<0.000000e+00> : vector<16x128xf32>
    %7 = tpu.matmul %4, %6, %cst {dimension_numbers = #tpu.dot_dimension_numbers<[1], [0], [0], [1], [0, 0, 1, 1], [], []>} : vector<16x4xf32>, vector<4x128xf32>, vector<16x128xf32> -> vector<16x128xf32>
    %c1_i32 = arith.constant 1 : i32
    %8 = arith.addi %1, %c1_i32 : i32
    %c0_4 = arith.constant 0 : index
    %9 = arith.index_cast %8 : i32 to index
    %c0_5 = arith.constant 0 : index
    %10 = vector.load %arg2[%c0_4, %9, %c0_5] : memref<1x18x4xf32, #tpu.memory_space<vmem>>, vector<1x16x4xf32>
    %11 = vector.shape_cast %10 : vector<1x16x4xf32> to vector<16x4xf32>
    %c1 = arith.constant 1 : index
    %c0_6 = arith.constant 0 : index
    %c0_7 = arith.constant 0 : index
    %12 = vector.load %arg3[%c1, %c0_6, %c0_7] : memref<3x4x128xf32, #tpu.memory_space<vmem>>, vector<1x4x128xf32>
    %13 = vector.shape_cast %12 : vector<1x4x128xf32> to vector<4x128xf32>
    %cst_8 = arith.constant dense<0.000000e+00> : vector<16x128xf32>
    %14 = tpu.matmul %11, %13, %cst_8 {dimension_numbers = #tpu.dot_dimension_numbers<[1], [0], [0], [1], [0, 0, 1, 1], [], []>} : vector<16x4xf32>, vector<4x128xf32>, vector<16x128xf32> -> vector<16x128xf32>
    %15 = arith.addf %7, %14 : vector<16x128xf32>
    %c2_i32 = arith.constant 2 : i32
    %16 = arith.addi %1, %c2_i32 : i32
    %c0_9 = arith.constant 0 : index
    %17 = arith.index_cast %16 : i32 to index
    %c0_10 = arith.constant 0 : index
    %18 = vector.load %arg2[%c0_9, %17, %c0_10] : memref<1x18x4xf32, #tpu.memory_space<vmem>>, vector<1x16x4xf32>
    %19 = vector.shape_cast %18 : vector<1x16x4xf32> to vector<16x4xf32>
    %c2 = arith.constant 2 : index
    %c0_11 = arith.constant 0 : index
    %c0_12 = arith.constant 0 : index
    %20 = vector.load %arg3[%c2, %c0_11, %c0_12] : memref<3x4x128xf32, #tpu.memory_space<vmem>>, vector<1x4x128xf32>
    %21 = vector.shape_cast %20 : vector<1x4x128xf32> to vector<4x128xf32>
    %cst_13 = arith.constant dense<0.000000e+00> : vector<16x128xf32>
    %22 = tpu.matmul %19, %21, %cst_13 {dimension_numbers = #tpu.dot_dimension_numbers<[1], [0], [0], [1], [0, 0, 1, 1], [], []>} : vector<16x4xf32>, vector<4x128xf32>, vector<16x128xf32> -> vector<16x128xf32>
    %23 = arith.addf %15, %22 : vector<16x128xf32>
    %c0_14 = arith.constant 0 : index
    %c0_15 = arith.constant 0 : index
    %c0_16 = arith.constant 0 : index
    %24 = vector.load %arg4[%c0_14, %c0_15, %c0_16] : memref<1x16x128xf32, #tpu.memory_space<vmem>>, vector<1x16x128xf32>
    %25 = vector.shape_cast %24 : vector<1x16x128xf32> to vector<16x128xf32>
    %26 = vector.shape_cast %23 : vector<16x128xf32> to vector<1x16x128xf32>
    tpu.vector_store %arg4[%c0_14, %c0_15, %c0_16], %26 {strides = array<i32>} : memref<1x16x128xf32, #tpu.memory_space<vmem>>, vector<1x16x128xf32>,
    return
  }
  func.func @transform_0(%arg0: i32, %arg1: i32) -> (i32, i32, i32) {
    %c0_i32 = arith.constant 0 : i32
    %c0_i32_0 = arith.constant 0 : i32
    %c0_i32_1 = arith.constant 0 : i32
    return %arg0, %c0_i32, %c0_i32_0 : i32, i32, i32
  }
  func.func @transform_1(%arg0: i32, %arg1: i32) -> (i32, i32, i32) {
    %c0_i32 = arith.constant 0 : i32
    %c0_i32_0 = arith.constant 0 : i32
    %c0_i32_1 = arith.constant 0 : i32
    %c0_i32_2 = arith.constant 0 : i32
    return %c0_i32, %c0_i32_0, %c0_i32_1 : i32, i32, i32
  }
  func.func @transform_2(%arg0: i32, %arg1: i32) -> (i32, i32, i32) {
    %c0_i32 = arith.constant 0 : i32
    %c0_i32_0 = arith.constant 0 : i32
    return %arg0, %arg1, %c0_i32 : i32, i32, i32
  }
}

</mosaic_0001>

<llo_original>
// kernel: tpu_custom_call.1
$region0: #{tpu_custom_call.1}
  #allocation0 [shape = 'u32[]', space=smem, size = 0x4, offset = 0x4, fixed_abs, tag = 'smem constant byte address 0x4 - core index']
  #allocation1 [shape = 'u32[144,128]{1,0:T(1,128)}', space=vmem, size = 0x12000, scoped, tag = 'internal scratch']
  %s0 = inlined_call_operand.vmem [shape: f32[2,18,4], index: 0, kind: input, shape index: {}]
  %s1 = inlined_call_operand.vmem [shape: f32[3,4,128], index: 1, kind: input, shape index: {}]
  %s2 = inlined_call_operand.hbm [shape: f32[2,16,128], index: 2, kind: output, shape index: {}]
  %s3 = sld [smem:[#allocation0]]
  $region41: #{tpu_custom_call.1} parent=0
    _
  %s5 = ssub.s32 1, %s3
  %s6 = scalar_select 0, %s5, %s3
  $region1: #{tpu_custom_call.1} parent=0
    #allocation2 [shape = 'u8[16384]{0}', space=vmem, size = 0x4000, scoped, tag = 'output window, operand 0']
    #allocation3 [shape = 's32[2]{0}', space=sflag, size = 0x8, scoped, tag = 'scoped memory for tpu_custom_call.1']
    %7 = vsyncpa [#allocation3], 0
    %s8 = scalar_lea.sflag [#allocation3], 1
    %9 = vsyncpa %s8, 0
    loop: start=0, step=1, limit=4
    $region2: #{tpu_custom_call.1} parent=1 // loop_pre_header
      _
    $region3: #{tpu_custom_call.1} parent=1 // loop_header
      %s11 = sphi 0, %s15
      %p12 = scmp.ge.s32.totalorder %s11, 4
      %s18 = sphi 0, %s30
      %s19 = sphi 0, %s26
      %s20 = sphi 0, %s18
      %s21 = sphi 0, %s19
      %s22 = sphi 0, %s20
      %s23 = sphi 0, %s21
      %s33 = sphi 0, %s35
      %s36 = sphi 0, %s33
      %s37 = sphi 0, %s36
      %s53 = sphi 0, %s37
      %s57 = sphi 0, %s57
      %s59 = sphi 0, %s57
      %s60 = sphi 0, %s59
      %s74 = sphi 0, %s60
      %s82 = sphi 0, %s84
      %s85 = sphi 0, %s82
      %s86 = sphi 0, %s85
      %s102 = sphi 0, %s86
    $region4: #{tpu_custom_call.1} parent=1 // loop_header_branch
      %14 = sbr.rel (%p12) target = $region8
    $region5: #{tpu_custom_call.1} parent=1 // loop_body
      %s16 = ssub.s32 %s11, 1
      %s17 = ssub.s32 %s11, 2
      %s24 = sadd.s32 1, %s19
      %p25 = scmp.ge.s32.totalorder %s24, 1
      %s26 = scalar_select %p25, 0, %s24
      %s27 = sadd.s32 1, %s18
      %s28 = scalar_select %p25, %s27, %s18
      %p29 = scmp.ge.s32.totalorder %s28, 2
      %s30 = scalar_select %p29, 0, %s28
      %s31 = ssub.s32 %s18, %s30
      %p32 = scmp.eq.s32.totalorder %s31, 0
      %s34 = sadd.s32 %s33, 1
      %s35 = scalar_select %p32, %s33, %s34
      %p38 = pneg %p32
      %p39 = scmp.eq.s32.totalorder %s11, 1
      %p40 = por %p38, %p39
      %p41 = scmp.ne.s32.totalorder %s33, %s36
      %p42 = scmp.eq.s32.totalorder %s11, 0
      %p43 = por %p41, %p42
      %p44 = scmp.ne.s32.totalorder %s33, %s36
      %p45 = scmp.eq.s32.totalorder %s16, 1
      %p46 = por %p44, %p45
      %p47 = scmp.ne.s32.totalorder %s36, %s37
      %p48 = scmp.eq.s32.totalorder %s16, 0
      %p49 = por %p47, %p48
      %p50 = scmp.ne.s32.totalorder %s36, %s37
      %p51 = scmp.eq.s32.totalorder %s17, 1
      %p52 = por %p50, %p51
      %p54 = scmp.ne.s32.totalorder %s37, %s53
      %p55 = scmp.eq.s32.totalorder %s17, 0
      %p56 = por %p54, %p55
      %s58 = sadd.s32 %s57, 1
      %p61 = scmp.eq.s32.totalorder %s11, 1
      %p62 = scmp.ne.s32.totalorder %s57, %s59
      %p63 = scmp.eq.s32.totalorder %s11, 0
      %p64 = por %p62, %p63
      %p65 = scmp.ne.s32.totalorder %s57, %s59
      %p66 = scmp.eq.s32.totalorder %s16, 1
      %p67 = por %p65, %p66
      %p68 = scmp.ne.s32.totalorder %s59, %s60
      %p69 = scmp.eq.s32.totalorder %s16, 0
      %p70 = por %p68, %p69
      %p71 = scmp.ne.s32.totalorder %s59, %s60
      %p72 = scmp.eq.s32.totalorder %s17, 1
      %p73 = por %p71, %p72
      %p75 = scmp.ne.s32.totalorder %s60, %s74
      %p76 = scmp.eq.s32.totalorder %s17, 0
      %p77 = por %p75, %p76
      %s78 = ssub.s32 %s18, %s30
      %s79 = ssub.s32 %s19, %s26
      %s80 = sor.u32 %s78, %s79
      %p81 = scmp.eq.s32.totalorder %s80, 0
      %s83 = sadd.s32 %s82, 1
      %s84 = scalar_select %p81, %s82, %s83
      %p87 = pneg %p81
      %p88 = scmp.eq.s32.totalorder %s11, 1
      %p89 = por %p87, %p88
      %p90 = scmp.ne.s32.totalorder %s82, %s85
      %p91 = scmp.eq.s32.totalorder %s11, 0
      %p92 = por %p90, %p91
      %p93 = scmp.ne.s32.totalorder %s82, %s85
      %p94 = scmp.eq.s32.totalorder %s16, 1
      %p95 = por %p93, %p94
      %p96 = scmp.ne.s32.totalorder %s85, %s86
      %p97 = scmp.eq.s32.totalorder %s16, 0
      %p98 = por %p96, %p97
      %p99 = scmp.ne.s32.totalorder %s85, %s86
      %p100 = scmp.eq.s32.totalorder %s17, 1
      %p101 = por %p99, %p100
      %p103 = scmp.ne.s32.totalorder %s86, %s102
      %p104 = scmp.eq.s32.totalorder %s17, 0
      %p105 = por %p103, %p104
      %p106 = scmp.le.s32.totalorder 1, %s11
      %p107 = scmp.lt.s32.totalorder %s11, 3
      %p108 = pnand %p106, %p107
      %p109 = pneg %p108
      // Predicated region
      $region9: #{tpu_custom_call.1} parent=5 // pred_check
        _
      $region10: #{tpu_custom_call.1} parent=5 // pred_check_branch
        %111 = sbr.rel (%p108) target = $region12
      $region11: #{tpu_custom_call.1} parent=5 // pred_region
        %s112 = ssub.s32 %s11, 1
        // Predicated region
        $region13: #{tpu_custom_call.1} parent=11 // pred_check
          %p113 = pneg %p70
        $region14: #{tpu_custom_call.1} parent=11 // pred_check_branch
          %115 = sbr.rel (%p113) target = $region16
        $region15: #{tpu_custom_call.1} parent=11 // pred_region
          _
        $region16: #{tpu_custom_call.1} parent=11 // pred_fallthru
          _
      $region12: #{tpu_custom_call.1} parent=5 // pred_fallthru
        _
      %p116 = scmp.lt.s32.totalorder %s11, 2
      // Predicated region
      $region17: #{tpu_custom_call.1} parent=5 // pred_check
        %p117 = pneg %p116
      $region18: #{tpu_custom_call.1} parent=5 // pred_check_branch
        %119 = sbr.rel (%p117) target = $region20
      $region19: #{tpu_custom_call.1} parent=5 // pred_region
        // Predicated region
        $region21: #{tpu_custom_call.1} parent=19 // pred_check
          %p120 = pneg %p43
        $region22: #{tpu_custom_call.1} parent=19 // pred_check_branch
          %122 = sbr.rel (%p120) target = $region24
        $region23: #{tpu_custom_call.1} parent=19 // pred_region
          %p123 = scmp.lt.s32.totalorder %s18, 1
          %s124 = scalar_select %p123, %s18, 1
          %s125 = smul.addr %s124, 3
          %s126 = smul.addr %s125, 8
          %s127 = scalar_lea.vmem %s0, %s126
        $region24: #{tpu_custom_call.1} parent=19 // pred_fallthru
          _
      $region20: #{tpu_custom_call.1} parent=5 // pred_fallthru
        _
      %p128 = scmp.le.s32.totalorder 1, %s11
      %p129 = scmp.lt.s32.totalorder %s11, 3
      %p130 = pnand %p128, %p129
      %p131 = pneg %p130
      // Predicated region
      $region25: #{tpu_custom_call.1} parent=5 // pred_check
        _
      $region26: #{tpu_custom_call.1} parent=5 // pred_check_branch
        %133 = sbr.rel (%p130) target = $region28
      $region27: #{tpu_custom_call.1} parent=5 // pred_region
        %s134 = ssub.s32 %s11, 1
        %p135 = scmp.lt.s32.totalorder %s20, 1
        %s136 = scalar_select %p135, %s20, 1
        %s137 = smul.addr %s136, 3
        %s138 = smul.addr %s137, 8
        %s139 = scalar_lea.vmem %s0, %s138
        %p140 = pneg %p49
        %p141 = pneg %p46
        %p142 = pneg %p70
        %p143 = pneg %p67
        %p144 = pneg %p98
        %p145 = pneg %p95
        %s146 = sand.u32 %s85, 1
        %s147 = scalar_lea.sflag [#allocation3], %s146
        %s148 = sand.u32 %s85, 1
        %s149 = smul.addr %s148, 16
        %s150 = scalar_lea.vmem [#allocation2], %s149
        %p151 = scmp.lt.s32.totalorder %s20, 1
        %s152 = scalar_select %p151, %s20, 1
        %s153 = smul.addr %s152, 3
        %s154 = smul.addr %s153, 8
        %s155 = scalar_lea.vmem %s0, %s154
        %s156 = smul.u32 2, %s21
        %s157 = smul.u32 %s21, 16
        %s158 = scalar_lea.vmem %s155, %s157
        %v159 = vld [vmem:[%s158] sm:$0xff]
        %v160 = vld [vmem:[%s158 + $0x8] sm:$0xff]
        %v161 = vld [vmem:[%s1] sm:$0xf]
        %s162 = sadd.s32 %s157, 1
        %s163 = scalar_lea.vmem %s155, %s162
        %v164 = vld [vmem:[%s163] sm:$0xff]
        %v165 = vld [vmem:[%s163 + $0x8] sm:$0xff]
        %s166 = scalar_lea.vmem %s1, 4
        %v167 = vld [vmem:[%s166] sm:$0xf]
        %vm168 = vcmask 31744
        %v170 = vsel %vm168, %v164, 0
        %v173 = vsel %vm168, %v165, 0
        %vm175 = vcmask 1043456
        %v177 = vsel %vm175, %v167, 0
        %179 = vmatprep.subr.mxu0 0.0
        %180 = vmatpush1.msra.mxu0 %v177
        %181 = vmatprep.subr.mxu0 0.0
        %182 = vmatpush1.msra.mxu0 0.0
        %183 = vmatprep.subr.mxu0 0.0
        %184 = vmatpush1.msra.mxu0 0.0
        %185 = vmatprep.subr.mxu0 0.0
        %186 = vmatpush1.msra.mxu0 0.0
        %187 = vmatprep.subr.mxu0 0.0
        %188 = vmatpush1.msra.mxu0 0.0
        %189 = vmatprep.subr.mxu0 0.0
        %190 = vmatpush1.msra.mxu0 0.0
        %191 = vmatprep.subr.mxu0 0.0
        %192 = vmatpush1.msra.mxu0 0.0
        %193 = vmatprep.subr.mxu0 0.0
        %194 = vmatpush1.msra.mxu0 0.0
        %195 = vmatprep.subr.mxu0 0.0
        %196 = vmatpush1.msra.mxu0 0.0
        %197 = vmatprep.subr.mxu0 0.0
        %198 = vmatpush1.msra.mxu0 0.0
        %199 = vmatprep.subr.mxu0 0.0
        %200 = vmatpush1.msra.mxu0 0.0
        %201 = vmatprep.subr.mxu0 0.0
        %202 = vmatpush1.msra.mxu0 0.0
        %203 = vmatprep.subr.mxu0 0.0
        %204 = vmatpush1.msra.mxu0 0.0
        %205 = vmatprep.subr.mxu0 0.0
        %206 = vmatpush1.msra.mxu0 0.0
        %207 = vmatprep.subr.mxu0 0.0
        %208 = vmatpush1.msra.mxu0 0.0
        %209 = vmatprep.subr.mxu0 0.0
        %210 = vmatpush1.msra.mxu0 0.0
        %211 = vmatprep.subr.mxu0 0.0
        %212 = vmatpush1.msra.mxu0 0.0
        %213 = vmatprep.subr.mxu0 0.0
        %214 = vmatpush1.msra.mxu0 0.0
        %215 = vmatprep.subr.mxu0 0.0
        %216 = vmatpush1.msra.mxu0 0.0
        %217 = vmatprep.subr.mxu0 0.0
        %218 = vmatpush1.msra.mxu0 0.0
        %219 = vmatprep.subr.mxu0 0.0
        %220 = vmatpush1.msra.mxu0 0.0
        %221 = vmatprep.subr.mxu0 0.0
        %222 = vmatpush1.msra.mxu0 0.0
        %223 = vmatprep.subr.mxu0 0.0
        %224 = vmatpush1.msra.mxu0 0.0
        %225 = vmatprep.subr.mxu0 0.0
        %226 = vmatpush1.msra.mxu0 0.0
        %227 = vmatprep.subr.mxu0 0.0
        %228 = vmatpush1.msra.mxu0 0.0
        %229 = vmatprep.subr.mxu0 0.0
        %230 = vmatpush1.msra.mxu0 0.0
        %231 = vmatprep.subr.mxu0 0.0
        %232 = vmatpush1.msra.mxu0 0.0
        %233 = vmatprep.subr.mxu0 0.0
        %234 = vmatpush1.msra.mxu0 0.0
        %235 = vmatprep.subr.mxu0 0.0
        %236 = vmatpush1.msra.mxu0 0.0
        %237 = vmatprep.subr.mxu0 0.0
        %238 = vmatpush1.msra.mxu0 0.0
        %239 = vmatprep.subr.mxu0 0.0
        %240 = vmatpush1.msra.mxu0 0.0
        %241 = vmatprep.subr.mxu0 0.0
        %242 = vmatpush1.msra.mxu0 0.0
        %243 = vmatprep.mubr.f32.mxu0 0.0
        %244 = vmatmul.mubr.f32.gmra.mrb[0].mxu0 %v170
        %v245 = vpop.f32.mrb[0].mxu0
        %v246 = vadd.f32 0.0, %v245
        %v247 = vpop.f32.mrb[0].mxu0
        %248 = vmatprep.mubr.f32.mxu0 0.0
        %249 = vmatmul.mubr.f32.gmra.mrb[0].mxu0 %v173
        %v250 = vpop.f32.mrb[0].mxu0
        %v251 = vadd.f32 0.0, %v250
        %v252 = vpop.f32.mrb[0].mxu0
        %253 = vdwg.mxu0
        %v255 = vsel %vm168, %v159, 0
        %v258 = vsel %vm168, %v160, 0
        %v261 = vsel %vm175, %v161, 0
        %263 = vmatprep.subr.mxu0 0.0
        %264 = vmatpush1.msra.mxu0 %v261
        %265 = vmatprep.subr.mxu0 0.0
        %266 = vmatpush1.msra.mxu0 0.0
        %267 = vmatprep.subr.mxu0 0.0
        %268 = vmatpush1.msra.mxu0 0.0
        %269 = vmatprep.subr.mxu0 0.0
        %270 = vmatpush1.msra.mxu0 0.0
        %271 = vmatprep.subr.mxu0 0.0
        %272 = vmatpush1.msra.mxu0 0.0
        %273 = vmatprep.subr.mxu0 0.0
        %274 = vmatpush1.msra.mxu0 0.0
        %275 = vmatprep.subr.mxu0 0.0
        %276 = vmatpush1.msra.mxu0 0.0
        %277 = vmatprep.subr.mxu0 0.0
        %278 = vmatpush1.msra.mxu0 0.0
        %279 = vmatprep.subr.mxu0 0.0
        %280 = vmatpush1.msra.mxu0 0.0
        %281 = vmatprep.subr.mxu0 0.0
        %282 = vmatpush1.msra.mxu0 0.0
        %283 = vmatprep.subr.mxu0 0.0
        %284 = vmatpush1.msra.mxu0 0.0
        %285 = vmatprep.subr.mxu0 0.0
        %286 = vmatpush1.msra.mxu0 0.0
        %287 = vmatprep.subr.mxu0 0.0
        %288 = vmatpush1.msra.mxu0 0.0
        %289 = vmatprep.subr.mxu0 0.0
        %290 = vmatpush1.msra.mxu0 0.0
        %291 = vmatprep.subr.mxu0 0.0
        %292 = vmatpush1.msra.mxu0 0.0
        %293 = vmatprep.subr.mxu0 0.0
        %294 = vmatpush1.msra.mxu0 0.0
        %295 = vmatprep.subr.mxu0 0.0
        %296 = vmatpush1.msra.mxu0 0.0
        %297 = vmatprep.subr.mxu0 0.0
        %298 = vmatpush1.msra.mxu0 0.0
        %299 = vmatprep.subr.mxu0 0.0
        %300 = vmatpush1.msra.mxu0 0.0
        %301 = vmatprep.subr.mxu0 0.0
        %302 = vmatpush1.msra.mxu0 0.0
        %303 = vmatprep.subr.mxu0 0.0
        %304 = vmatpush1.msra.mxu0 0.0
        %305 = vmatprep.subr.mxu0 0.0
        %306 = vmatpush1.msra.mxu0 0.0
        %307 = vmatprep.subr.mxu0 0.0
        %308 = vmatpush1.msra.mxu0 0.0
        %309 = vmatprep.subr.mxu0 0.0
        %310 = vmatpush1.msra.mxu0 0.0
        %311 = vmatprep.subr.mxu0 0.0
        %312 = vmatpush1.msra.mxu0 0.0
        %313 = vmatprep.subr.mxu0 0.0
        %314 = vmatpush1.msra.mxu0 0.0
        %315 = vmatprep.subr.mxu0 0.0
        %316 = vmatpush1.msra.mxu0 0.0
        %317 = vmatprep.subr.mxu0 0.0
        %318 = vmatpush1.msra.mxu0 0.0
        %319 = vmatprep.subr.mxu0 0.0
        %320 = vmatpush1.msra.mxu0 0.0
        %321 = vmatprep.subr.mxu0 0.0
        %322 = vmatpush1.msra.mxu0 0.0
        %323 = vmatprep.subr.mxu0 0.0
        %324 = vmatpush1.msra.mxu0 0.0
        %325 = vmatprep.subr.mxu0 0.0
        %326 = vmatpush1.msra.mxu0 0.0
        %327 = vmatprep.mubr.f32.mxu0 0.0
        %328 = vmatmul.mubr.f32.gmra.mrb[0].mxu0 %v255
        %v329 = vpop.f32.mrb[0].mxu0
        %v330 = vadd.f32 %v246, %v329
        %v331 = vpop.f32.mrb[0].mxu0
        %332 = vmatprep.mubr.f32.mxu0 0.0
        %333 = vmatmul.mubr.f32.gmra.mrb[0].mxu0 %v258
        %v334 = vpop.f32.mrb[0].mxu0
        %v335 = vadd.f32 %v251, %v334
        %v336 = vpop.f32.mrb[0].mxu0
        %337 = vdwg.mxu0
        %s338 = sadd.s32 %s157, 2
        %s339 = scalar_lea.vmem %s155, %s338
        %v340 = vld [vmem:[%s339] sm:$0xff]
        %v341 = vld [vmem:[%s339 + $0x8] sm:$0xff]
        %s342 = scalar_lea.vmem %s1, 8
        %v343 = vld [vmem:[%s342] sm:$0xf]
        %v345 = vsel %vm168, %v340, 0
        %v348 = vsel %vm168, %v341, 0
        %v351 = vsel %vm175, %v343, 0
        %353 = vmatprep.subr.mxu0 0.0
        %354 = vmatpush1.msra.mxu0 %v351
        %355 = vmatprep.subr.mxu0 0.0
        %356 = vmatpush1.msra.mxu0 0.0
        %357 = vmatprep.subr.mxu0 0.0
        %358 = vmatpush1.msra.mxu0 0.0
        %359 = vmatprep.subr.mxu0 0.0
        %360 = vmatpush1.msra.mxu0 0.0
        %361 = vmatprep.subr.mxu0 0.0
        %362 = vmatpush1.msra.mxu0 0.0
        %363 = vmatprep.subr.mxu0 0.0
        %364 = vmatpush1.msra.mxu0 0.0
        %365 = vmatprep.subr.mxu0 0.0
        %366 = vmatpush1.msra.mxu0 0.0
        %367 = vmatprep.subr.mxu0 0.0
        %368 = vmatpush1.msra.mxu0 0.0
        %369 = vmatprep.subr.mxu0 0.0
        %370 = vmatpush1.msra.mxu0 0.0
        %371 = vmatprep.subr.mxu0 0.0
        %372 = vmatpush1.msra.mxu0 0.0
        %373 = vmatprep.subr.mxu0 0.0
        %374 = vmatpush1.msra.mxu0 0.0
        %375 = vmatprep.subr.mxu0 0.0
        %376 = vmatpush1.msra.mxu0 0.0
        %377 = vmatprep.subr.mxu0 0.0
        %378 = vmatpush1.msra.mxu0 0.0
        %379 = vmatprep.subr.mxu0 0.0
        %380 = vmatpush1.msra.mxu0 0.0
        %381 = vmatprep.subr.mxu0 0.0
        %382 = vmatpush1.msra.mxu0 0.0
        %383 = vmatprep.subr.mxu0 0.0
        %384 = vmatpush1.msra.mxu0 0.0
        %385 = vmatprep.subr.mxu0 0.0
        %386 = vmatpush1.msra.mxu0 0.0
        %387 = vmatprep.subr.mxu0 0.0
        %388 = vmatpush1.msra.mxu0 0.0
        %389 = vmatprep.subr.mxu0 0.0
        %390 = vmatpush1.msra.mxu0 0.0
        %391 = vmatprep.subr.mxu0 0.0
        %392 = vmatpush1.msra.mxu0 0.0
        %393 = vmatprep.subr.mxu0 0.0
        %394 = vmatpush1.msra.mxu0 0.0
        %395 = vmatprep.subr.mxu0 0.0
        %396 = vmatpush1.msra.mxu0 0.0
        %397 = vmatprep.subr.mxu0 0.0
        %398 = vmatpush1.msra.mxu0 0.0
        %399 = vmatprep.subr.mxu0 0.0
        %400 = vmatpush1.msra.mxu0 0.0
        %401 = vmatprep.subr.mxu0 0.0
        %402 = vmatpush1.msra.mxu0 0.0
        %403 = vmatprep.subr.mxu0 0.0
        %404 = vmatpush1.msra.mxu0 0.0
        %405 = vmatprep.subr.mxu0 0.0
        %406 = vmatpush1.msra.mxu0 0.0
        %407 = vmatprep.subr.mxu0 0.0
        %408 = vmatpush1.msra.mxu0 0.0
        %409 = vmatprep.subr.mxu0 0.0
        %410 = vmatpush1.msra.mxu0 0.0
        %411 = vmatprep.subr.mxu0 0.0
        %412 = vmatpush1.msra.mxu0 0.0
        %413 = vmatprep.subr.mxu0 0.0
        %414 = vmatpush1.msra.mxu0 0.0
        %415 = vmatprep.subr.mxu0 0.0
        %416 = vmatpush1.msra.mxu0 0.0
        %417 = vmatprep.mubr.f32.mxu0 0.0
        %418 = vmatmul.mubr.f32.gmra.mrb[0].mxu0 %v345
        %v419 = vpop.f32.mrb[0].mxu0
        %v420 = vadd.f32 0.0, %v419
        %v421 = vpop.f32.mrb[0].mxu0
        %422 = vmatprep.mubr.f32.mxu0 0.0
        %423 = vmatmul.mubr.f32.gmra.mrb[0].mxu0 %v348
        %v424 = vpop.f32.mrb[0].mxu0
        %v425 = vadd.f32 0.0, %v424
        %v426 = vpop.f32.mrb[0].mxu0
        %427 = vdwg.mxu0
        %v428 = vadd.f32 %v330, %v420
        %v429 = vadd.f32 %v335, %v425
        %430 = vst [vmem:[%s150] sm:$0xff] %v428
        %431 = vst [vmem:[%s150 + $0x8] sm:$0xff] %v429
        %s432 = sand.u32 %s85, 1
        %s433 = scalar_lea.sflag [#allocation3], %s432
        %s434 = sand.u32 %s85, 1
        %s435 = smul.addr %s434, 16
        %s436 = scalar_lea.vmem [#allocation2], %s435
        // Predicated region
        $region29: #{tpu_custom_call.1} parent=27 // pred_check
          %p437 = pneg %p95
        $region30: #{tpu_custom_call.1} parent=27 // pred_check_branch
          %439 = sbr.rel (%p437) target = $region32
        $region31: #{tpu_custom_call.1} parent=27 // pred_region
          %s440 = smul.u32 2, %s21
          %s442 = ssub.s32 256, 256
          %443 = vsyncadd %s433, %s442
          %s444 = smul.addr %s20, 2
          %s445 = sadd.s32 %s440, %s444
          %s446 = smul.addr %s445, 128
          %s447 = scalar_lea.hbm %s2, %s446
          %s448 = sshll.u32 %s436, 4
          %s449 = int_to_ptr.vmem [resolvable:$true] %s448
          %454 = dma.vmem_to_hbm [thread:$0]  %s449, 256, %s447, %s433, 128, 128, 8
        $region32: #{tpu_custom_call.1} parent=27 // pred_fallthru
          _
      $region28: #{tpu_custom_call.1} parent=5 // pred_fallthru
        _
      %p455 = scmp.le.s32.totalorder 2, %s11
      // Predicated region
      $region33: #{tpu_custom_call.1} parent=5 // pred_check
        %p456 = pneg %p455
      $region34: #{tpu_custom_call.1} parent=5 // pred_check_branch
        %458 = sbr.rel (%p456) target = $region36
      $region35: #{tpu_custom_call.1} parent=5 // pred_region
        %s459 = ssub.s32 %s11, 2
        // Predicated region
        $region37: #{tpu_custom_call.1} parent=35 // pred_check
          %p460 = pneg %p101
        $region38: #{tpu_custom_call.1} parent=35 // pred_check_branch
          %462 = sbr.rel (%p460) target = $region40
        $region39: #{tpu_custom_call.1} parent=35 // pred_region
          %s463 = sand.u32 %s86, 1
          %s464 = scalar_lea.sflag [#allocation3], %s463
          %s465 = sand.u32 %s86, 1
          %s466 = smul.addr %s465, 16
          %s467 = scalar_lea.vmem [#allocation2], %s466
          %468 = dma.done %s464, 256
        $region40: #{tpu_custom_call.1} parent=35 // pred_fallthru
          _
      $region36: #{tpu_custom_call.1} parent=5 // pred_fallthru
        _
    $region6: #{tpu_custom_call.1} parent=1 // loop_footer
      %s15 = sadd.s32 1, %s11
    $region7: #{tpu_custom_call.1} parent=1 // loop_footer_branch
      %10 = sbr.rel target = $region3
    $region8: #{tpu_custom_call.1} parent=1 // loop_exit
      _
    %469 = vsyncpa [#allocation3], 1
    %s470 = scalar_lea.sflag [#allocation3], 1
    %471 = vsyncpa %s470, 1

</llo_original>
